<compile_context>
chip_gen: v5e
topology: v5e:2x2
jax: 0.10.0
libtpu: 0.0.40
codegen_flags: <defaults>
</compile_context>

<pallas_src>
import functools
import math

import jax
import jax.numpy as jnp
from jax import lax
from jax.experimental import pallas as pl
from jax.experimental.pallas import tpu as pltpu

_LANES = 128
_TARGET_BUF_BYTES = 4 << 20    # ~4 MiB per input stream per pipeline buffer
_TOTAL_BUF_BUDGET = 24 << 20   # all double-buffered input streams together
_VMEM_HEADROOM = 6 << 20
_VMEM_CAP = 44 << 20           # leaves headroom under v7x's 64 MiB physical VMEM


def _round_up(x, m):
    return ((x + m - 1) // m) * m


def _num_tensorcores_per_chip():
    """Best-effort generation query: 2 TCs/chip on v7x, 1 on v5e/v6e.

    Falling back to 1 is always correct (just loses the shard parallelism)."""
    try:
        kind = jax.devices()[0].device_kind.lower()
    except Exception:
        return 1
    return 2 if "7" in kind else 1


def _wl2_kernel(*refs, total_rows, tile_rows, steps_per_shard, steps_total,
                has_weights, ragged):
    if has_weights:
        pred_ref, targ_ref, w_ref, acc_ref = refs
    else:
        pred_ref, targ_ref, acc_ref = refs

    c = pl.program_id(0)   # shard axis ("parallel", one per TensorCore)
    i = pl.program_id(1)   # streaming/reduction axis ("arbitrary")

    @pl.when(i == 0)
    def _():
        acc_ref[...] = jnp.zeros_like(acc_ref)

    logical = c * steps_per_shard + i

    # Skip clamped duplicate blocks (shard with fewer real steps) entirely.
    @pl.when(logical < steps_total)
    def _():
        d = pred_ref[...].astype(jnp.float32) - targ_ref[...].astype(jnp.float32)
        sq = d * d
        if has_weights:
            # Weight block is (tile, 1) per-row f32 or (tile, 128) native-dtype
            # full-broadcast fallback; either broadcasts against sq.
            sq = sq * w_ref[...].astype(jnp.float32)

        def _accumulate(x):
            # Fold (tile, 128) -> (8, 128) with pure VPU adds (layout-preserving
            # reshape groups sublanes into native (8, 128) tiles) and accumulate
            # into the resident output block.
            acc_ref[...] += x.reshape(tile_rows // 8, 8, _LANES).sum(axis=0)

        if ragged:
            # Only the last logical block has rows past the true extent; keep
            # the iota/select mask off the hot path.
            @pl.when(logical == steps_total - 1)
            def _():
                row = (lax.broadcasted_iota(jnp.int32, (tile_rows, 1), 0)
                       + logical * tile_rows)
                # Keep jnp.where (select): OOB rows may hold garbage/NaN and a
                # multiply-by-0 mask would propagate them.
                _accumulate(jnp.where(row < total_rows, sq, 0.0))

            @pl.when(logical != steps_total - 1)
            def _():
                _accumulate(sq)
        else:
            _accumulate(sq)


def _sum_weighted_sq(pred_s, targ_s, w_s, w_lane_bytes):
    """Sum over all valid rows of (pred - targ)^2 [* w], f32 scalar.

    pred_s/targ_s are [rows, 128] slabs; w_s is None, [rows, 1] f32, or a
    [rows, 128] native-dtype slab. w_lane_bytes is the effective per-lane VMEM
    byte cost of the weight stream (4 for the lane-padded per-row vector)."""
    rows = pred_s.shape[0]

    # Per-lane byte cost of each streamed array (for VMEM budgeting).
    lane_bytes = [pred_s.dtype.itemsize, targ_s.dtype.itemsize]
    if w_s is not None:
        lane_bytes.append(w_lane_bytes)

    # Sublane multiple for the narrowest streamed dtype (8 for 32-bit,
    # 16 for 16-bit, 32 for 8-bit packing).
    min_item = min([pred_s.dtype.itemsize, targ_s.dtype.itemsize]
                   + ([w_s.dtype.itemsize] if w_s is not None else []))
    mult = max(8, 32 // min_item)

    # Dtype-aware tile: ~4 MiB per input buffer, <=24 MiB total double-buffered.
    per_buf_rows = _TARGET_BUF_BYTES // (_LANES * max(lane_bytes[:2]))
    budget_rows = _TOTAL_BUF_BUDGET // (2 * _LANES * sum(lane_bytes))
    tile_rows = min(per_buf_rows, budget_rows, _round_up(rows, mult))
    tile_rows = max(mult, (tile_rows // mult) * mult)

    steps_total = pl.cdiv(rows, tile_rows)
    num_shards = 2 if (_num_tensorcores_per_chip() >= 2 and steps_total >= 2) else 1
    steps = pl.cdiv(steps_total, num_shards)
    ragged = (rows % tile_rows) != 0

    def blk(c, i):
        # Clamp so an out-of-range logical block re-reads a valid block; its
        # contribution is skipped inside the kernel.
        return (jnp.minimum(c * steps + i, steps_total - 1), 0)

    in_specs = [pl.BlockSpec((tile_rows, _LANES), blk),
                pl.BlockSpec((tile_rows, _LANES), blk)]
    args = [pred_s, targ_s]
    if w_s is not None:
        in_specs.append(pl.BlockSpec((tile_rows, w_s.shape[1]), blk))
        args.append(w_s)

    kernel = functools.partial(
        _wl2_kernel, total_rows=rows, tile_rows=tile_rows,
        steps_per_shard=steps, steps_total=steps_total,
        has_weights=w_s is not None, ragged=ragged)

    # Explicit VMEM limit sized from the actual double-buffered working set so
    # the same tiling fits v5e/v6e/v7x scoped-VMEM differences.
    buf_bytes = 2 * tile_rows * _LANES * sum(lane_bytes)
    vmem_limit = int(min(_VMEM_CAP, max(16 << 20, buf_bytes + _VMEM_HEADROOM)))

    streamed = sum(int(a.size) * a.dtype.itemsize for a in args)
    flops = (4 if w_s is not None else 3) * int(pred_s.size)

    out = pl.pallas_call(
        kernel,
        out_shape=jax.ShapeDtypeStruct((num_shards * 8, _LANES), jnp.float32),
        grid_spec=pltpu.PrefetchScalarGridSpec(
            num_scalar_prefetch=0,
            grid=(num_shards, steps),
            in_specs=in_specs,
            out_specs=pl.BlockSpec((8, _LANES), lambda c, i: (c, 0)),
        ),
        compiler_params=pltpu.CompilerParams(
            dimension_semantics=("parallel", "arbitrary"),
            vmem_limit_bytes=vmem_limit,
        ),
        cost_estimate=pl.CostEstimate(
            flops=int(flops), transcendentals=0,
            bytes_accessed=int(streamed + num_shards * 8 * _LANES * 4)),
    )(*args)
    # Tiny final reduction (num_shards * 8 * 128 f32 partials).
    return jnp.sum(out)


def _per_row_weights(pred_shape, w):
    """(rows, 1) f32 per-row weights if `w` is constant within every 128-lane
    row of the flattened tensor, else None (e.g. per-channel NCHW weights with
    H*W % 128 == 0)."""
    n = math.prod(pred_shape)
    if w.ndim > len(pred_shape) or n % _LANES != 0:
        return None
    wb_shape = (1,) * (len(pred_shape) - w.ndim) + tuple(w.shape)
    nontrivial = [ax for ax, s in enumerate(wb_shape) if s != 1]
    if not nontrivial:
        return None
    last_nt = max(nontrivial)
    trailing = math.prod(pred_shape[last_nt + 1:])
    if trailing % _LANES != 0:
        return None
    # TODO(synk): pass the few channel weights via SMEM scalar-prefetch and
    # reconstruct per-row weights in-kernel to drop this (rows, 1) HBM stream
    # and its lane-padded VMEM cost entirely.
    lead = jnp.broadcast_to(w.reshape(wb_shape[:last_nt + 1]),
                            pred_shape[:last_nt + 1]).reshape(-1)
    return jnp.repeat(lead, trailing // _LANES).reshape(-1, 1).astype(jnp.float32)


def weighted_loss(pred, targ, weights=1.0):
    """mean((pred - targ)**2 * weights) with PyTorch-style broadcasting."""
    assert pred.shape == targ.shape
    n = pred.size
    w = jnp.asarray(weights)

    flat_p = pred.reshape(-1)
    flat_t = targ.reshape(-1)
    n_main = (n // _LANES) * _LANES

    scalar_w = (w.size == 1)
    w_rows = None if scalar_w else _per_row_weights(pred.shape, w)

    w_flat = None
    if not scalar_w and w_rows is None:
        # TODO(synk): general-broadcast fallback materializes full-size weights
        # in HBM; streamed in native dtype and cast to f32 inside the kernel.
        w_flat = jnp.broadcast_to(w, pred.shape).reshape(-1)

    # 128-aligned prefix goes through the Pallas kernel (no pad/concat copy).
    total = jnp.float32(0.0)
    if n_main > 0:
        pred_s = flat_p[:n_main].reshape(-1, _LANES)
        targ_s = flat_t[:n_main].reshape(-1, _LANES)
        if w_rows is not None:
            total = _sum_weighted_sq(pred_s, targ_s, w_rows, 4)
        elif w_flat is not None:
            w_s = w_flat[:n_main].reshape(-1, _LANES)
            total = _sum_weighted_sq(pred_s, targ_s, w_s, w_s.dtype.itemsize)
        else:
            total = _sum_weighted_sq(pred_s, targ_s, None, 0)

    # <128-element ragged tail: tiny jnp reduction instead of padding/copying
    # the whole array.
    # TODO(synk): a manual-DMA (memory_space=pl.ANY) path could also avoid the
    # prefix-slice copy in the ragged case.
    if n_main < n:
        dt = (flat_p[n_main:].astype(jnp.float32)
              - flat_t[n_main:].astype(jnp.float32))
        sq_tail = dt * dt
        if w_flat is not None:
            sq_tail = sq_tail * w_flat[n_main:].astype(jnp.float32)
        total = total + jnp.sum(sq_tail)

    if scalar_w:
        # Scalar weight was never streamed; fold it into the final scale.
        return total * (w.reshape(()).astype(jnp.float32) / n)
    return total / n


if __name__ == "__main__":
    key = jax.random.PRNGKey(0)
    k1, k2, k3 = jax.random.split(key, 3)

    # Small NCHW inputs matching the DDIM call site.
    pred = jax.random.normal(k1, (2, 4, 16, 16), dtype=jnp.float32)
    targ = jax.random.normal(k2, (2, 4, 16, 16), dtype=jnp.float32)
    weights = jax.random.uniform(k3, (1, 4, 1, 1), dtype=jnp.float32)

    # 1) per-channel weights (per-row weight path, no full broadcast in HBM).
    out = weighted_loss(pred, targ, weights)
    jax.block_until_ready(out)
    ref = jnp.mean(((pred - targ) ** 2) * weights)
    assert jnp.allclose(out, ref, rtol=1e-5, atol=1e-6), (out, ref)

    # 2) default scalar weight (PyTorch default arg) — weights not streamed.
    out_s = weighted_loss(pred, targ)
    ref_s = jnp.mean((pred - targ) ** 2)
    assert jnp.allclose(out_s, ref_s, rtol=1e-5, atol=1e-6), (out_s, ref_s)

    # 3) bf16 inputs, larger tensor: native-dtype streaming, dtype-aware tile.
    kp, kt = jax.random.split(k1)
    p_big = jax.random.normal(kp, (2, 8, 128, 128), dtype=jnp.bfloat16)
    t_big = jax.random.normal(kt, (2, 8, 128, 128), dtype=jnp.bfloat16)
    out_b = weighted_loss(p_big, t_big, 0.5)
    ref_b = 0.5 * jnp.mean(
        (p_big.astype(jnp.float32) - t_big.astype(jnp.float32)) ** 2)
    assert jnp.allclose(out_b, ref_b, rtol=1e-4, atol=1e-6), (out_b, ref_b)

    # 4) per-row weights with a ragged last block (rows % tile_rows != 0).
    p4 = jax.random.normal(k2, (5, 5, 128, 100), dtype=jnp.float32)
    t4 = jax.random.normal(k3, (5, 5, 128, 100), dtype=jnp.float32)
    w4 = jax.random.uniform(k1, (1, 5, 1, 1), dtype=jnp.float32)
    out4 = weighted_loss(p4, t4, w4)
    ref4 = jnp.mean(((p4 - t4) ** 2) * w4)
    assert jnp.allclose(out4, ref4, rtol=1e-5, atol=1e-6), (out4, ref4)

    # 5) numel % 128 != 0: kernel on aligned prefix + tiny jnp tail reduction,
    #    full-broadcast weight fallback.
    p5 = jax.random.normal(k3, (3, 5, 24, 40), dtype=jnp.float32)
    t5 = jax.random.normal(k1, (3, 5, 24, 40), dtype=jnp.float32)
    w5 = jax.random.uniform(k2, (1, 5, 1, 1), dtype=jnp.float32)
    out5 = weighted_loss(p5, t5, w5)
    ref5 = jnp.mean(((p5 - t5) ** 2) * w5)
    assert jnp.allclose(out5, ref5, rtol=1e-5, atol=1e-6), (out5, ref5)

    print("KERNEL_OK")
</pallas_src>

<mosaic_0001>
module attributes {stable_mosaic.version = 11 : i64} {
  func.func @_wl2_kernel(%arg0: i32, %arg1: i32, %arg2: memref<16x128xf32, #tpu.memory_space<vmem>>, %arg3: memref<16x128xf32, #tpu.memory_space<vmem>>, %arg4: memref<16x1xf32, #tpu.memory_space<vmem>>, %arg5: memref<8x128xf32, #tpu.memory_space<vmem>>) attributes {dimension_semantics = [#tpu.dimension_semantics<parallel>, #tpu.dimension_semantics<arbitrary>], iteration_bounds = array<i64: 1, 1>, scalar_prefetch = 0 : i64, scratch_operands = 0 : i64, tpu.core_type = #tpu.core_type<tc>, window_params = [{transform_indices = @transform_0, window_bounds = array<i64: 16, 128>}, {transform_indices = @transform_1, window_bounds = array<i64: 16, 128>}, {transform_indices = @transform_2, window_bounds = array<i64: 16, 1>}, {transform_indices = @transform_3, window_bounds = array<i64: 8, 128>}]} {
    %c0_i32 = arith.constant 0 : i32
    %0 = arith.cmpi eq, %arg1, %c0_i32 : i32
    %1 = arith.extui %0 : i1 to i32
    %c0_i32_0 = arith.constant 0 : i32
    %2 = arith.cmpi ne, %1, %c0_i32_0 : i32
    scf.if %2 {
      %cst = arith.constant 0.000000e+00 : f32
      %8 = vector.broadcast %cst : f32 to vector<8x128xf32>
      %c0 = arith.constant 0 : index
      %c0_3 = arith.constant 0 : index
      %9 = vector.load %arg5[%c0, %c0_3] : memref<8x128xf32, #tpu.memory_space<vmem>>, vector<8x128xf32>
      tpu.vector_store %arg5[%c0, %c0_3], %8 {strides = array<i32>} : memref<8x128xf32, #tpu.memory_space<vmem>>, vector<8x128xf32>,
    } else {
    }
    %c1_i32 = arith.constant 1 : i32
    %3 = arith.muli %arg0, %c1_i32 : i32
    %4 = arith.addi %3, %arg1 : i32
    %c1_i32_1 = arith.constant 1 : i32
    %5 = arith.cmpi slt, %4, %c1_i32_1 : i32
    %6 = arith.extui %5 : i1 to i32
    %c0_i32_2 = arith.constant 0 : i32
    %7 = arith.cmpi ne, %6, %c0_i32_2 : i32
    scf.if %7 {
      %c0 = arith.constant 0 : index
      %c0_3 = arith.constant 0 : index
      %8 = vector.load %arg2[%c0, %c0_3] : memref<16x128xf32, #tpu.memory_space<vmem>>, vector<16x128xf32>
      %c0_4 = arith.constant 0 : index
      %c0_5 = arith.constant 0 : index
      %9 = vector.load %arg3[%c0_4, %c0_5] : memref<16x128xf32, #tpu.memory_space<vmem>>, vector<16x128xf32>
      %10 = arith.subf %8, %9 : vector<16x128xf32>
      %11 = arith.mulf %10, %10 : vector<16x128xf32>
      %c0_6 = arith.constant 0 : index
      %c0_7 = arith.constant 0 : index
      %12 = vector.load %arg4[%c0_6, %c0_7] : memref<16x1xf32, #tpu.memory_space<vmem>>, vector<16x1xf32>
      %13 = vector.broadcast %12 : vector<16x1xf32> to vector<16x128xf32>
      %14 = arith.mulf %11, %13 : vector<16x128xf32>
      %c0_8 = arith.constant 0 : index
      %c0_9 = arith.constant 0 : index
      %15 = vector.load %arg5[%c0_8, %c0_9] : memref<8x128xf32, #tpu.memory_space<vmem>>, vector<8x128xf32>
      %16 = vector.shape_cast %14 : vector<16x128xf32> to vector<2x8x128xf32>
      %cst = arith.constant dense<0.000000e+00> : vector<8x128xf32>
      %17 = vector.multi_reduction <add>, %16, %cst [0] : vector<2x8x128xf32> to vector<8x128xf32>
      %18 = arith.addf %15, %17 : vector<8x128xf32>
      %c0_10 = arith.constant 0 : index
      %c0_11 = arith.constant 0 : index
      %19 = vector.load %arg5[%c0_10, %c0_11] : memref<8x128xf32, #tpu.memory_space<vmem>>, vector<8x128xf32>
      tpu.vector_store %arg5[%c0_10, %c0_11], %18 {strides = array<i32>} : memref<8x128xf32, #tpu.memory_space<vmem>>, vector<8x128xf32>,
    } else {
    }
    return
  }
  func.func @transform_0(%arg0: i32, %arg1: i32) -> (i32, i32) {
    %c1_i32 = arith.constant 1 : i32
    %0 = arith.muli %arg0, %c1_i32 : i32
    %1 = arith.addi %0, %arg1 : i32
    %c0_i32 = arith.constant 0 : i32
    %2 = arith.minsi %1, %c0_i32 : i32
    %c0_i32_0 = arith.constant 0 : i32
    %c0_i32_1 = arith.constant 0 : i32
    return %2, %c0_i32_0 : i32, i32
  }
  func.func @transform_1(%arg0: i32, %arg1: i32) -> (i32, i32) {
    %c1_i32 = arith.constant 1 : i32
    %0 = arith.muli %arg0, %c1_i32 : i32
    %1 = arith.addi %0, %arg1 : i32
    %c0_i32 = arith.constant 0 : i32
    %2 = arith.minsi %1, %c0_i32 : i32
    %c0_i32_0 = arith.constant 0 : i32
    %c0_i32_1 = arith.constant 0 : i32
    return %2, %c0_i32_0 : i32, i32
  }
  func.func @transform_2(%arg0: i32, %arg1: i32) -> (i32, i32) {
    %c1_i32 = arith.constant 1 : i32
    %0 = arith.muli %arg0, %c1_i32 : i32
    %1 = arith.addi %0, %arg1 : i32
    %c0_i32 = arith.constant 0 : i32
    %2 = arith.minsi %1, %c0_i32 : i32
    %c0_i32_0 = arith.constant 0 : i32
    %c0_i32_1 = arith.constant 0 : i32
    return %2, %c0_i32_0 : i32, i32
  }
  func.func @transform_3(%arg0: i32, %arg1: i32) -> (i32, i32) {
    %c0_i32 = arith.constant 0 : i32
    %c0_i32_0 = arith.constant 0 : i32
    return %arg0, %c0_i32 : i32, i32
  }
}

</mosaic_0001>

<llo_original>
// kernel: tpu_custom_call.1
$region0: #{tpu_custom_call.1}
  #allocation0 [shape = 'u32[]', space=smem, size = 0x4, offset = 0x4, fixed_abs, tag = 'smem constant byte address 0x4 - core index']
  #allocation1 [shape = 'u32[72,128]{1,0:T(1,128)}', space=vmem, size = 0x9000, scoped, tag = 'internal scratch']
  %s0 = inlined_call_operand.vmem [shape: f32[16,128], index: 0, kind: input, shape index: {}]
  %s1 = inlined_call_operand.hbm [shape: f32[16,128], index: 1, kind: input, shape index: {}]
  %s2 = inlined_call_operand.vmem [shape: f32[16,1], index: 2, kind: input, shape index: {}]
  %s3 = inlined_call_operand.hbm [shape: f32[8,128], index: 3, kind: output, shape index: {}]
  %s4 = sld [smem:[#allocation0]]
  $region34: #{tpu_custom_call.1} parent=0
    _
  %s6 = ssub.s32 1, %s4
  %s7 = scalar_select 0, %s6, %s4
  $region1: #{tpu_custom_call.1} parent=0
    #allocation2 [shape = 'u8[8192]{0}', space=vmem, size = 0x2000, scoped, tag = 'input window, operand 1, single buffered']
    #allocation3 [shape = 's32[1]{0}', space=sflag, size = 0x4, scoped, tag = 'scoped memory for tpu_custom_call.1']
    #allocation4 [shape = 's32[1]{0}', space=sflag, size = 0x4, scoped, tag = 'scoped memory for tpu_custom_call.1']
    #allocation5 [shape = 'u8[4096]{0}', space=vmem, size = 0x1000, scoped, tag = 'output window, operand 0, single buffered']
    %8 = vsyncpa [#allocation3], 0
    %9 = vsyncpa [#allocation4], 0
    // Predicated region
    $region2: #{tpu_custom_call.1} parent=1 // pred_check
      _
    $region3: #{tpu_custom_call.1} parent=1 // pred_check_branch
      %11 = sbr.rel (0) target = $region5
    $region4: #{tpu_custom_call.1} parent=1 // pred_region
      %s12 = sadd.s32 0, 0
      %p13 = scmp.lt.s32.totalorder %s12, 0
      %s14 = scalar_select %p13, %s12, 0
      %s15 = smul.u32 2, %s14
      %p16 = scmp.lt.s32.totalorder %s15, 1
      %s17 = scalar_select %p16, %s15, 1
      %s18 = smul.addr %s17, 8
      %s19 = scalar_lea.vmem %s0, %s18
      %s20 = sadd.s32 0, 0
      %p21 = scmp.lt.s32.totalorder %s20, 0
      %s22 = scalar_select %p21, %s20, 0
      %s23 = smul.u32 2, %s22
    $region5: #{tpu_custom_call.1} parent=1 // pred_fallthru
      _
    // Predicated region
    $region6: #{tpu_custom_call.1} parent=1 // pred_check
      _
    $region7: #{tpu_custom_call.1} parent=1 // pred_check_branch
      %25 = sbr.rel (0) target = $region9
    $region8: #{tpu_custom_call.1} parent=1 // pred_region
      %s26 = sadd.s32 0, 0
      %p27 = scmp.lt.s32.totalorder %s26, 0
      %s28 = scalar_select %p27, %s26, 0
      %s29 = smul.u32 2, %s28
      %31 = vsyncadd [#allocation3], 0
      %s32 = smul.addr %s29, 8
      %s33 = scalar_lea.hbm %s1, %s32
      %s34 = sshll.u32 %s33, 4
      %s35 = int_to_ptr.hbm [resolvable:$true] %s34
      %s36 = sshll.u32 [#allocation2], 4
      %s37 = int_to_ptr.vmem [resolvable:$true] %s36
      %42 = dma.hbm_to_vmem [thread:$0]  %s35, 256, %s37, [#allocation3], 128, 128, 8
    $region9: #{tpu_custom_call.1} parent=1 // pred_fallthru
      _
    // Predicated region
    $region10: #{tpu_custom_call.1} parent=1 // pred_check
      _
    $region11: #{tpu_custom_call.1} parent=1 // pred_check_branch
      %44 = sbr.rel (0) target = $region13
    $region12: #{tpu_custom_call.1} parent=1 // pred_region
      %s45 = sadd.s32 0, 0
      %p46 = scmp.lt.s32.totalorder %s45, 0
      %s47 = scalar_select %p46, %s45, 0
      %s48 = smul.u32 2, %s47
      %p49 = scmp.lt.s32.totalorder %s48, 1
      %s50 = scalar_select %p49, %s48, 1
      %s51 = smul.addr %s50, 8
      %s52 = scalar_lea.vmem %s2, %s51
      %s53 = sadd.s32 0, 0
      %p54 = scmp.lt.s32.totalorder %s53, 0
      %s55 = scalar_select %p54, %s53, 0
      %s56 = smul.u32 2, %s55
    $region13: #{tpu_custom_call.1} parent=1 // pred_fallthru
      _
    // Predicated region
    $region14: #{tpu_custom_call.1} parent=1 // pred_check
      _
    $region15: #{tpu_custom_call.1} parent=1 // pred_check_branch
      %58 = sbr.rel (0) target = $region17
    $region16: #{tpu_custom_call.1} parent=1 // pred_region
      %60 = dma.done [#allocation3], 256
    $region17: #{tpu_custom_call.1} parent=1 // pred_fallthru
      _
    %s61 = sadd.s32 0, 0
    %p62 = scmp.lt.s32.totalorder %s61, 0
    %s63 = scalar_select %p62, %s61, 0
    %s64 = smul.u32 2, %s63
    %p65 = scmp.lt.s32.totalorder %s64, 1
    %s66 = scalar_select %p65, %s64, 1
    %s67 = smul.addr %s66, 8
    %s68 = scalar_lea.vmem %s0, %s67
    %s69 = sadd.s32 0, 0
    %p70 = scmp.lt.s32.totalorder %s69, 0
    %s71 = scalar_select %p70, %s69, 0
    %s72 = smul.u32 2, %s71
    %p73 = scmp.lt.s32.totalorder %s72, 1
    %s74 = scalar_select %p73, %s72, 1
    %s75 = smul.addr %s74, 8
    %s76 = scalar_lea.vmem %s2, %s75
    %s77 = sadd.s32 0, 0
    %p78 = scmp.lt.s32.totalorder %s77, 0
    %s79 = scalar_select %p78, %s77, 0
    %s80 = smul.u32 2, %s79
    %p81 = scmp.lt.s32.totalorder %s80, 1
    %s82 = scalar_select %p81, %s80, 1
    %s83 = smul.addr %s82, 8
    %s84 = scalar_lea.vmem %s0, %s83
    %s85 = sadd.s32 0, 0
    %p86 = scmp.lt.s32.totalorder %s85, 0
    %s87 = scalar_select %p86, %s85, 0
    %s88 = smul.u32 2, %s87
    %s89 = sadd.s32 0, 0
    %p90 = scmp.lt.s32.totalorder %s89, 0
    %s91 = scalar_select %p90, %s89, 0
    %s92 = smul.u32 2, %s91
    %s93 = sadd.s32 0, 0
    %p94 = scmp.lt.s32.totalorder %s93, 0
    %s95 = scalar_select %p94, %s93, 0
    %s96 = smul.u32 2, %s95
    %p97 = scmp.lt.s32.totalorder %s96, 1
    %s98 = scalar_select %p97, %s96, 1
    %s99 = smul.addr %s98, 8
    %s100 = scalar_lea.vmem %s2, %s99
    %s101 = sadd.s32 0, 0
    %p102 = scmp.lt.s32.totalorder %s101, 0
    %s103 = scalar_select %p102, %s101, 0
    %s104 = smul.u32 2, %s103
    %p105 = scmp.eq.s32.totalorder 0, 0
    // Predicated region
    $region18: #{tpu_custom_call.1} parent=1 // pred_check
      %p106 = pneg %p105
    $region19: #{tpu_custom_call.1} parent=1 // pred_check_branch
      %108 = sbr.rel (%p106) target = $region21
    $region20: #{tpu_custom_call.1} parent=1 // pred_region
      %109 = vst [vmem:[#allocation5] sm:$0xff] 0.0
    $region21: #{tpu_custom_call.1} parent=1 // pred_fallthru
      _
    %s110 = sadd.s32 0, 0
    %p111 = scmp.lt.s32.totalorder %s110, 1
    // Predicated region
    $region22: #{tpu_custom_call.1} parent=1 // pred_check
      %p112 = pneg %p111
    $region23: #{tpu_custom_call.1} parent=1 // pred_check_branch
      %114 = sbr.rel (%p112) target = $region25
    $region24: #{tpu_custom_call.1} parent=1 // pred_region
      %v115 = vld [vmem:[%s84] sm:$0xff]
      %v116 = vld [vmem:[%s84 + $0x8] sm:$0xff]
      %v117 = vld [vmem:[#allocation2] sm:$0xff]
      %v118 = vld [vmem:[#allocation2 + $0x8] sm:$0xff]
      %v119 = vsub.f32 %v115, %v117
      %v120 = vsub.f32 %v116, %v118
      %v121 = vmul.f32 %v119, %v119
      %v122 = vmul.f32 %v120, %v120
      %v123 = vld [vmem:[%s100] sm:$0xff]
      %v124 = vld [vmem:[%s100 + $0x8] sm:$0xff]
      %126 = vset.pattern.permute.xlu0 0
      %127 = vperm.xlu0 %126, %v123
      %v128 = vpop.permute.xlu0 %127
      %131 = vset.pattern.permute.xlu0 0
      %132 = vperm.xlu0 %131, %v124
      %v133 = vpop.permute.xlu0 %132
      %v135 = vmul.f32 %v121, %v128
      %v136 = vmul.f32 %v122, %v133
      %v137 = vld [vmem:[#allocation5] sm:$0xff]
      %v138 = vadd.f32 %v135, %v136
      %v139 = vadd.f32 %v137, %v138
      %140 = vst [vmem:[#allocation5] sm:$0xff] %v139
    $region25: #{tpu_custom_call.1} parent=1 // pred_fallthru
      _
    // Predicated region
    $region26: #{tpu_custom_call.1} parent=1 // pred_check
      _
    $region27: #{tpu_custom_call.1} parent=1 // pred_check_branch
      %142 = sbr.rel (0) target = $region29
    $region28: #{tpu_custom_call.1} parent=1 // pred_region
      %144 = vsyncadd [#allocation4], 0
      %s146 = sshll.u32 [#allocation5], 4
      %s147 = int_to_ptr.vmem [resolvable:$true] %s146
      %s148 = sshll.u32 %s3, 4
      %s149 = int_to_ptr.hbm [resolvable:$true] %s148
      %151 = dma.vmem_to_hbm [thread:$0]  %s147, 128, %s149, [#allocation4]
    $region29: #{tpu_custom_call.1} parent=1 // pred_fallthru
      _
    // Predicated region
    $region30: #{tpu_custom_call.1} parent=1 // pred_check
      _
    $region31: #{tpu_custom_call.1} parent=1 // pred_check_branch
      %153 = sbr.rel (0) target = $region33
    $region32: #{tpu_custom_call.1} parent=1 // pred_region
      %155 = dma.done [#allocation4], 128
    $region33: #{tpu_custom_call.1} parent=1 // pred_fallthru
      _
    %156 = vsyncpa [#allocation3], 1
    %157 = vsyncpa [#allocation4], 1

</llo_original>
